<compile_context>
chip_gen: v7x
topology: tpu7x:2x2x1
jax: 0.10.0
libtpu: 0.0.40
codegen_flags: <defaults>
</compile_context>

<pallas_src>
import jax
import jax.numpy as jnp
from jax.experimental import pallas as pl
from jax.experimental.pallas import tpu as pltpu

EPS = 1e-12  # same eps as torch.nn.functional.normalize default


def _cdiv(a, b):
    return (a + b - 1) // b


def _l2norm_kernel(x_ref, o_ref):
    # Block: (TILE_N, C, TILE_HW).  Reduction is over axis 1 (channels); lanes
    # (HW) and rows (N) are independent, so garbage in masked tail blocks only
    # produces garbage that is discarded by the masked store.
    x = x_ref[...].astype(jnp.float32)
    sq_sum = jnp.sum(x * x, axis=1, keepdims=True)            # (TILE_N, 1, TILE_HW)
    inv = jax.lax.rsqrt(jnp.maximum(sq_sum, EPS * EPS))       # == 1 / max(sqrt(s), EPS)
    # Re-read x for the scaling multiply so the full f32 upcast does not have
    # to stay live across the reduction (lower VMEM / vreg pressure).
    o_ref[...] = (x_ref[...].astype(jnp.float32) * inv).astype(o_ref.dtype)


def _pick_tiles(n, c, hw, target_block_bytes=2 << 20, min_grid_steps=4):
    """Choose (TILE_N, TILE_HW).

    Blocks target ~target_block_bytes of f32-equivalent input (MiB-scale DMAs
    amortize the ~0.35 us per-grid-step overhead), TILE_HW is a multiple of
    128 (or equals HW when HW <= 128) so full tiles get unmasked lane-dense
    stores, and the grid keeps >= min_grid_steps so v7x's two TensorCores are
    both fed.
    """
    target_elems = max(1, target_block_bytes // (4 * c))      # TILE_N * TILE_HW budget

    if hw <= 128:
        tile_hw = hw                                          # full (untiled) lane axis
    else:
        cap = (hw // 128) * 128                               # keep last tile ragged, not fully OOB
        tile_hw = max(128, (min(target_elems, cap) // 128) * 128)

    tile_n = max(1, min(n, target_elems // max(tile_hw, 1)))

    def steps(tn, thw):
        return _cdiv(n, tn) * _cdiv(hw, thw)

    # Ensure enough parallel steps (v7x megacore); shrink N tile first, then HW.
    while steps(tile_n, tile_hw) < min_grid_steps and tile_n > 1:
        tile_n = (tile_n + 1) // 2
    while steps(tile_n, tile_hw) < min_grid_steps and tile_hw > 128:
        tile_hw = max(128, _cdiv(tile_hw // 2, 128) * 128)

    return tile_n, tile_hw


def l2norm(x):
    """x: (N, C, H, W). Returns x normalized to unit L2 norm along dim=1."""
    N, C, H, W = x.shape
    HW = H * W
    x3 = x.reshape(N, C, HW)  # collapses the two minor dims; no data movement

    itemsize = jnp.dtype(x.dtype).itemsize
    TILE_N, TILE_HW = _pick_tiles(N, C, HW)
    grid = (_cdiv(N, TILE_N), _cdiv(HW, TILE_HW))

    # VMEM footprint: 2x double-buffered input + 2x output (native dtype) plus
    # ~2 f32-sized temporaries inside the body.  Set an explicit limit with
    # headroom so larger tiles are not rejected by the scoped-VMEM default
    # (16 MiB on v5e) while staying far below every generation's physical VMEM.
    block_elems = TILE_N * C * TILE_HW
    footprint = 4 * block_elems * itemsize + 2 * block_elems * 4
    vmem_limit = int(max(32 << 20, footprint + (8 << 20)))
    # TODO(synk): add a C-tiled variant (grid axis over C marked "arbitrary",
    # f32 sq-sum scratch accumulator, pl.when finalize) for extreme channel
    # counts where even a (1, C, 128) block overflows v7x's 64 MiB VMEM.

    out = pl.pallas_call(
        _l2norm_kernel,
        out_shape=jax.ShapeDtypeStruct((N, C, HW), x.dtype),
        grid=grid,
        in_specs=[pl.BlockSpec((TILE_N, C, TILE_HW), lambda n, t: (n, 0, t))],
        out_specs=pl.BlockSpec((TILE_N, C, TILE_HW), lambda n, t: (n, 0, t)),
        compiler_params=pltpu.CompilerParams(
            dimension_semantics=("parallel", "parallel"),
            vmem_limit_bytes=vmem_limit,
        ),
        cost_estimate=pl.CostEstimate(
            flops=3 * N * C * HW,
            transcendentals=N * HW,
            bytes_accessed=2 * N * C * HW * itemsize,
        ),
    )(x3)

    return out.reshape(N, C, H, W)


def _ref_l2norm(x):
    norm = jnp.sqrt(jnp.sum(x.astype(jnp.float32) ** 2, axis=1, keepdims=True))
    return (x.astype(jnp.float32) / jnp.maximum(norm, EPS)).astype(x.dtype)


if __name__ == "__main__":
    k1, k2 = jax.random.split(jax.random.PRNGKey(0))

    # Primary shape implied by the module (batch=2, channels=4, spatial=16).
    x = jax.random.normal(k1, (2, 4, 16, 16), dtype=jnp.float32)
    y = l2norm(x)
    jax.block_until_ready(y)
    assert jnp.allclose(y, _ref_l2norm(x), atol=1e-6, rtol=1e-6), "mismatch vs reference"

    # Ragged-tile coverage: HW = 132 (not a multiple of 128) and N not
    # divisible by TILE_N — exercises the masked last blocks on both grid axes.
    x2 = jax.random.normal(k2, (3, 5, 12, 11), dtype=jnp.float32)
    y2 = l2norm(x2)
    jax.block_until_ready(y2)
    assert jnp.allclose(y2, _ref_l2norm(x2), atol=1e-6, rtol=1e-6), "mismatch (ragged tiles)"

    print("KERNEL_OK")
</pallas_src>

<mosaic_0001>
module attributes {stable_mosaic.version = 11 : i64} {
  func.func @_l2norm_kernel(%arg0: i32, %arg1: i32, %arg2: memref<1x4x128xf32, #tpu.memory_space<vmem>>, %arg3: memref<1x4x128xf32, #tpu.memory_space<vmem>>) attributes {dimension_semantics = [#tpu.dimension_semantics<parallel>, #tpu.dimension_semantics<parallel>], iteration_bounds = array<i64: 2, 2>, scalar_prefetch = 0 : i64, scratch_operands = 0 : i64, tpu.core_type = #tpu.core_type<tc>, window_params = [{transform_indices = @transform_0, window_bounds = array<i64: 1, 4, 128>}, {transform_indices = @transform_1, window_bounds = array<i64: 1, 4, 128>}]} {
    %c0 = arith.constant 0 : index
    %c0_0 = arith.constant 0 : index
    %c0_1 = arith.constant 0 : index
    %0 = vector.load %arg2[%c0, %c0_0, %c0_1] : memref<1x4x128xf32, #tpu.memory_space<vmem>>, vector<1x4x128xf32>
    %1 = arith.mulf %0, %0 : vector<1x4x128xf32>
    %cst = arith.constant dense<0.000000e+00> : vector<1x128xf32>
    %2 = vector.multi_reduction <add>, %1, %cst [1] : vector<1x4x128xf32> to vector<1x128xf32>
    %3 = vector.shape_cast %2 : vector<1x128xf32> to vector<1x1x128xf32>
    %cst_2 = arith.constant 1.000000e-24 : f32
    %4 = vector.broadcast %cst_2 : f32 to vector<1x1x128xf32>
    %5 = arith.maximumf %3, %4 : vector<1x1x128xf32>
    %6 = math.rsqrt %5 : vector<1x1x128xf32>
    %c0_3 = arith.constant 0 : index
    %c0_4 = arith.constant 0 : index
    %c0_5 = arith.constant 0 : index
    %7 = vector.load %arg2[%c0_3, %c0_4, %c0_5] : memref<1x4x128xf32, #tpu.memory_space<vmem>>, vector<1x4x128xf32>
    %8 = vector.broadcast %6 : vector<1x1x128xf32> to vector<1x4x128xf32>
    %9 = arith.mulf %7, %8 : vector<1x4x128xf32>
    %c0_6 = arith.constant 0 : index
    %c0_7 = arith.constant 0 : index
    %c0_8 = arith.constant 0 : index
    %10 = vector.load %arg3[%c0_6, %c0_7, %c0_8] : memref<1x4x128xf32, #tpu.memory_space<vmem>>, vector<1x4x128xf32>
    tpu.vector_store %arg3[%c0_6, %c0_7, %c0_8], %9 {strides = array<i32>} : memref<1x4x128xf32, #tpu.memory_space<vmem>>, vector<1x4x128xf32>,
    return
  }
  func.func @transform_0(%arg0: i32, %arg1: i32) -> (i32, i32, i32) {
    %c0_i32 = arith.constant 0 : i32
    %c0_i32_0 = arith.constant 0 : i32
    return %arg0, %c0_i32, %arg1 : i32, i32, i32
  }
  func.func @transform_1(%arg0: i32, %arg1: i32) -> (i32, i32, i32) {
    %c0_i32 = arith.constant 0 : i32
    %c0_i32_0 = arith.constant 0 : i32
    return %arg0, %c0_i32, %arg1 : i32, i32, i32
  }
}

</mosaic_0001>

<llo_original>
// kernel: tpu_custom_call.1
$region0: #{tpu_custom_call.1}
  #allocation0 [shape = 'u32[]', space=smem, size = 0x4, offset = 0x4, fixed_abs, tag = 'smem constant byte address 0x4 - core index']
  #allocation1 [shape = 'u32[144,128]{1,0:T(1,128)}', space=vmem, size = 0x12000, scoped, tag = 'internal scratch']
  %s0 = inlined_call_operand.hbm [shape: f32[2,4,256], index: 0, kind: input, shape index: {}]
  %s1 = inlined_call_operand.hbm [shape: f32[2,4,256], index: 1, kind: output, shape index: {}]
  %s2 = sld [smem:[#allocation0]]
  $region41: #{tpu_custom_call.1} parent=0
    _
  %s4 = ssub.s32 1, %s2
  %s5 = scalar_select 0, %s4, %s2
  $region1: #{tpu_custom_call.1} parent=0
    #allocation2 [shape = 'u8[4096]{0}', space=vmem, size = 0x1000, scoped, tag = 'input window, operand 0']
    #allocation3 [shape = 's32[2]{0}', space=sflag, size = 0x8, scoped, tag = 'scoped memory for tpu_custom_call.1']
    #allocation4 [shape = 's32[2]{0}', space=sflag, size = 0x8, scoped, tag = 'scoped memory for tpu_custom_call.1']
    #allocation5 [shape = 'u8[4096]{0}', space=vmem, size = 0x1000, scoped, tag = 'output window, operand 0']
    %6 = vsyncpa [#allocation3], 0
    %s7 = scalar_lea.sflag [#allocation3], 1
    %8 = vsyncpa %s7, 0
    %9 = vsyncpa [#allocation4], 0
    %s10 = scalar_lea.sflag [#allocation4], 1
    %11 = vsyncpa %s10, 0
    loop: start=0, step=1, limit=6
    $region2: #{tpu_custom_call.1} parent=1 // loop_pre_header
      _
    $region3: #{tpu_custom_call.1} parent=1 // loop_header
      %s13 = sphi 0, %s17
      %p14 = scmp.ge.s32.totalorder %s13, 6
      %s20 = sphi 0, %s32
      %s21 = sphi 0, %s28
      %s22 = sphi 0, %s20
      %s23 = sphi 0, %s21
      %s24 = sphi 0, %s22
      %s25 = sphi 0, %s23
      %s37 = sphi 0, %s39
      %s40 = sphi 0, %s37
      %s41 = sphi 0, %s40
      %s57 = sphi 0, %s41
      %s65 = sphi 0, %s67
      %s68 = sphi 0, %s65
      %s69 = sphi 0, %s68
      %s85 = sphi 0, %s69
    $region4: #{tpu_custom_call.1} parent=1 // loop_header_branch
      %16 = sbr.rel (%p14) target = $region8
    $region5: #{tpu_custom_call.1} parent=1 // loop_body
      %s18 = ssub.s32 %s13, 1
      %s19 = ssub.s32 %s13, 2
      %s26 = sadd.s32 1, %s21
      %p27 = scmp.ge.s32.totalorder %s26, 2
      %s28 = scalar_select %p27, 0, %s26
      %s29 = sadd.s32 1, %s20
      %s30 = scalar_select %p27, %s29, %s20
      %p31 = scmp.ge.s32.totalorder %s30, 2
      %s32 = scalar_select %p31, 0, %s30
      %s33 = ssub.s32 %s20, %s32
      %s34 = ssub.s32 %s21, %s28
      %s35 = sor.u32 %s33, %s34
      %p36 = scmp.eq.s32.totalorder %s35, 0
      %s38 = sadd.s32 %s37, 1
      %s39 = scalar_select %p36, %s37, %s38
      %p42 = pneg %p36
      %p43 = scmp.eq.s32.totalorder %s13, 3
      %p44 = por %p42, %p43
      %p45 = scmp.ne.s32.totalorder %s37, %s40
      %p46 = scmp.eq.s32.totalorder %s13, 0
      %p47 = por %p45, %p46
      %p48 = scmp.ne.s32.totalorder %s37, %s40
      %p49 = scmp.eq.s32.totalorder %s18, 3
      %p50 = por %p48, %p49
      %p51 = scmp.ne.s32.totalorder %s40, %s41
      %p52 = scmp.eq.s32.totalorder %s18, 0
      %p53 = por %p51, %p52
      %p54 = scmp.ne.s32.totalorder %s40, %s41
      %p55 = scmp.eq.s32.totalorder %s19, 3
      %p56 = por %p54, %p55
      %p58 = scmp.ne.s32.totalorder %s41, %s57
      %p59 = scmp.eq.s32.totalorder %s19, 0
      %p60 = por %p58, %p59
      %s61 = ssub.s32 %s20, %s32
      %s62 = ssub.s32 %s21, %s28
      %s63 = sor.u32 %s61, %s62
      %p64 = scmp.eq.s32.totalorder %s63, 0
      %s66 = sadd.s32 %s65, 1
      %s67 = scalar_select %p64, %s65, %s66
      %p70 = pneg %p64
      %p71 = scmp.eq.s32.totalorder %s13, 3
      %p72 = por %p70, %p71
      %p73 = scmp.ne.s32.totalorder %s65, %s68
      %p74 = scmp.eq.s32.totalorder %s13, 0
      %p75 = por %p73, %p74
      %p76 = scmp.ne.s32.totalorder %s65, %s68
      %p77 = scmp.eq.s32.totalorder %s18, 3
      %p78 = por %p76, %p77
      %p79 = scmp.ne.s32.totalorder %s68, %s69
      %p80 = scmp.eq.s32.totalorder %s18, 0
      %p81 = por %p79, %p80
      %p82 = scmp.ne.s32.totalorder %s68, %s69
      %p83 = scmp.eq.s32.totalorder %s19, 3
      %p84 = por %p82, %p83
      %p86 = scmp.ne.s32.totalorder %s69, %s85
      %p87 = scmp.eq.s32.totalorder %s19, 0
      %p88 = por %p86, %p87
      %p89 = scmp.le.s32.totalorder 1, %s13
      %p90 = scmp.lt.s32.totalorder %s13, 5
      %p91 = pnand %p89, %p90
      %p92 = pneg %p91
      // Predicated region
      $region9: #{tpu_custom_call.1} parent=5 // pred_check
        _
      $region10: #{tpu_custom_call.1} parent=5 // pred_check_branch
        %94 = sbr.rel (%p91) target = $region12
      $region11: #{tpu_custom_call.1} parent=5 // pred_region
        %s95 = ssub.s32 %s13, 1
      $region12: #{tpu_custom_call.1} parent=5 // pred_fallthru
        _
      %p96 = scmp.lt.s32.totalorder %s13, 4
      // Predicated region
      $region13: #{tpu_custom_call.1} parent=5 // pred_check
        %p97 = pneg %p96
      $region14: #{tpu_custom_call.1} parent=5 // pred_check_branch
        %99 = sbr.rel (%p97) target = $region16
      $region15: #{tpu_custom_call.1} parent=5 // pred_region
        // Predicated region
        $region17: #{tpu_custom_call.1} parent=15 // pred_check
          %p100 = pneg %p47
        $region18: #{tpu_custom_call.1} parent=15 // pred_check_branch
          %102 = sbr.rel (%p100) target = $region20
        $region19: #{tpu_custom_call.1} parent=15 // pred_region
          %s103 = sand.u32 %s37, 1
          %s104 = scalar_lea.sflag [#allocation3], %s103
          %s105 = sand.u32 %s37, 1
          %s106 = smul.addr %s105, 4
          %s107 = scalar_lea.vmem [#allocation2], %s106
          %s109 = ssub.s32 64, 64
          %110 = vsyncadd %s104, %s109
          %s111 = smul.addr %s20, 2
          %s112 = sadd.s32 %s21, %s111
          %s113 = smul.addr %s112, 64
          %s114 = scalar_lea.hbm %s0, %s113
          %s116 = sshll.u32 %s107, 4
          %s117 = int_to_ptr.vmem [resolvable:$true] %s116
          %119 = dma.hbm_to_vmem [thread:$0]  %s114, 64, %s117, %s104
        $region20: #{tpu_custom_call.1} parent=15 // pred_fallthru
          _
      $region16: #{tpu_custom_call.1} parent=5 // pred_fallthru
        _
      %p120 = scmp.le.s32.totalorder 1, %s13
      %p121 = scmp.lt.s32.totalorder %s13, 5
      %p122 = pnand %p120, %p121
      %p123 = pneg %p122
      // Predicated region
      $region21: #{tpu_custom_call.1} parent=5 // pred_check
        _
      $region22: #{tpu_custom_call.1} parent=5 // pred_check_branch
        %125 = sbr.rel (%p122) target = $region24
      $region23: #{tpu_custom_call.1} parent=5 // pred_region
        %s126 = ssub.s32 %s13, 1
        %s127 = sand.u32 %s40, 1
        %s128 = scalar_lea.sflag [#allocation3], %s127
        %s129 = sand.u32 %s40, 1
        %s130 = smul.addr %s129, 4
        %s131 = scalar_lea.vmem [#allocation2], %s130
        // Predicated region
        $region25: #{tpu_custom_call.1} parent=23 // pred_check
          %p132 = pneg %p53
        $region26: #{tpu_custom_call.1} parent=23 // pred_check_branch
          %134 = sbr.rel (%p132) target = $region28
        $region27: #{tpu_custom_call.1} parent=23 // pred_region
          %135 = dma.done %s128, 64
        $region28: #{tpu_custom_call.1} parent=23 // pred_fallthru
          _
        %s136 = sand.u32 %s40, 1
        %s137 = scalar_lea.sflag [#allocation3], %s136
        %s138 = sand.u32 %s40, 1
        %s139 = smul.addr %s138, 4
        %s140 = scalar_lea.vmem [#allocation2], %s139
        %p141 = pneg %p53
        %p142 = pneg %p50
        %p143 = pneg %p81
        %p144 = pneg %p78
        %s145 = sand.u32 %s68, 1
        %s146 = scalar_lea.sflag [#allocation4], %s145
        %s147 = sand.u32 %s68, 1
        %s148 = smul.addr %s147, 4
        %s149 = scalar_lea.vmem [#allocation5], %s148
        %v150 = vld [vmem:[%s131] sm:$0xf]
        %v151 = vmul.f32 %v150, %v150
        %vm152 = vcmask 1043456
        %v153 = vsel %vm152, %v151, 0.0
        %v154 = vrot.slane %v153, 4
        %v155 = vadd.f32 %v153, %v154
        %v156 = vrot.slane %v155, 2
        %v157 = vadd.f32 %v155, %v156
        %v158 = vrot.slane %v157, 1
        %v159 = vadd.f32 %v157, %v158
        %v160 = vmax.f32 %v159, 1e-24
        %v161 = vrsqrt.pop %v160
        %v162 = vmul.f32 %v150, %v161
        %163 = vst [vmem:[%s149] sm:$0xf] %v162
        %s164 = sand.u32 %s68, 1
        %s165 = scalar_lea.sflag [#allocation4], %s164
        %s166 = sand.u32 %s68, 1
        %s167 = smul.addr %s166, 4
        %s168 = scalar_lea.vmem [#allocation5], %s167
        // Predicated region
        $region29: #{tpu_custom_call.1} parent=23 // pred_check
          %p169 = pneg %p78
        $region30: #{tpu_custom_call.1} parent=23 // pred_check_branch
          %171 = sbr.rel (%p169) target = $region32
        $region31: #{tpu_custom_call.1} parent=23 // pred_region
          %s173 = ssub.s32 64, 64
          %174 = vsyncadd %s165, %s173
          %s175 = smul.addr %s22, 2
          %s176 = sadd.s32 %s23, %s175
          %s177 = smul.addr %s176, 64
          %s178 = scalar_lea.hbm %s1, %s177
          %s180 = sshll.u32 %s168, 4
          %s181 = int_to_ptr.vmem [resolvable:$true] %s180
          %183 = dma.vmem_to_hbm [thread:$0]  %s181, 64, %s178, %s165
        $region32: #{tpu_custom_call.1} parent=23 // pred_fallthru
          _
      $region24: #{tpu_custom_call.1} parent=5 // pred_fallthru
        _
      %p184 = scmp.le.s32.totalorder 2, %s13
      // Predicated region
      $region33: #{tpu_custom_call.1} parent=5 // pred_check
        %p185 = pneg %p184
      $region34: #{tpu_custom_call.1} parent=5 // pred_check_branch
        %187 = sbr.rel (%p185) target = $region36
      $region35: #{tpu_custom_call.1} parent=5 // pred_region
        %s188 = ssub.s32 %s13, 2
        // Predicated region
        $region37: #{tpu_custom_call.1} parent=35 // pred_check
          %p189 = pneg %p84
        $region38: #{tpu_custom_call.1} parent=35 // pred_check_branch
          %191 = sbr.rel (%p189) target = $region40
        $region39: #{tpu_custom_call.1} parent=35 // pred_region
          %s192 = sand.u32 %s69, 1
          %s193 = scalar_lea.sflag [#allocation4], %s192
          %s194 = sand.u32 %s69, 1
          %s195 = smul.addr %s194, 4
          %s196 = scalar_lea.vmem [#allocation5], %s195
          %197 = dma.done %s193, 64
        $region40: #{tpu_custom_call.1} parent=35 // pred_fallthru
          _
      $region36: #{tpu_custom_call.1} parent=5 // pred_fallthru
        _
    $region6: #{tpu_custom_call.1} parent=1 // loop_footer
      %s17 = sadd.s32 1, %s13
    $region7: #{tpu_custom_call.1} parent=1 // loop_footer_branch
      %12 = sbr.rel target = $region3
    $region8: #{tpu_custom_call.1} parent=1 // loop_exit
      _
    %198 = vsyncpa [#allocation3], 1
    %s199 = scalar_lea.sflag [#allocation3], 1
    %200 = vsyncpa %s199, 1
    %201 = vsyncpa [#allocation4], 1
    %s202 = scalar_lea.sflag [#allocation4], 1
    %203 = vsyncpa %s202, 1

</llo_original>
